<compile_context>
chip_gen: v7x
topology: tpu7x:2x2x1
jax: 0.10.0
libtpu: 0.0.40
codegen_flags: <defaults>
</compile_context>

<pallas_src>
import math

import jax
import jax.numpy as jnp
import numpy as np
from jax.experimental import pallas as pl
from jax.experimental.pallas import tpu as pltpu


def inte_pe_rand_kernel(coords_ref, mappings_ref, exp_var_ref, out_ref):
    # coords_ref:   [row_tile, dim]      (VMEM)
    # mappings_ref: [dim, col_tile]      (VMEM, resident along the row axis)
    # exp_var_ref:  [1, col_tile]        (VMEM, resident, precomputed in wrapper)
    # out_ref:      [row_tile, col_tile]
    #
    # The "sum of rank-1 matmuls" in the PyTorch loop is exactly a dense
    # matmul coords @ mappings -> run it on the MXU; everything grid-invariant
    # (exp_var) has been hoisted out of this body.
    enc = jnp.dot(coords_ref[...], mappings_ref[...],
                  preferred_element_type=jnp.float32)          # [row_tile, col_tile]
    out_ref[...] = (jnp.cos(enc) * exp_var_ref[...]).astype(out_ref.dtype)


def inte_pe_rand(coords, covar, mappings, *, row_tile=512, col_tile=None,
                 out_dtype=jnp.float32):
    """coords: [..., dim] float32, covar: [dim], mappings: [dim, pe_dim].

    row_tile: rows per grid step (multiple of 8). 256-1024 is the sweet spot
              for real row counts; it is shrunk automatically for small inputs.
              NOTE (v7x): keep rows // row_tile >= ~4 for 2-TensorCore balance.
    col_tile: pe_dim tile (multiple of 128) when pe_dim is large; defaults to
              the full pe_dim for pe_dim <= 1024.
    out_dtype: set jnp.bfloat16 if downstream tolerates it (halves the
               HBM write traffic on the output-write-bound path).
    """
    *lead, dim = coords.shape
    dim_m, pe_dim = mappings.shape
    assert dim_m == dim
    rows = int(math.prod(lead)) if lead else 1

    coords2d = coords.reshape(rows, dim).astype(jnp.float32)
    mappings = mappings.astype(jnp.float32)
    covar1d = covar.reshape(dim).astype(jnp.float32)

    # Grid-invariant factor, hoisted out of the kernel body (tiny [1, pe_dim]).
    exp_var = jnp.exp(
        -0.5 * jnp.sum((mappings * mappings) * covar1d[:, None], axis=0, keepdims=True)
    )  # [1, pe_dim]

    # --- tile selection -----------------------------------------------------
    # Row tile: multiple of 8, never (much) larger than the row count.
    rows_rounded = -(-rows // 8) * 8
    row_tile = max(8, (min(int(row_tile), rows_rounded) // 8) * 8)
    padded_rows = -(-rows // row_tile) * row_tile

    # Column tile over pe_dim (lane-dense, >=512 preferred for unmasked stores).
    if col_tile is None:
        if pe_dim > 1024 and pe_dim % 512 == 0:
            col_tile = 512
        else:
            col_tile = pe_dim
    if col_tile != pe_dim and (pe_dim % col_tile != 0 or col_tile % 128 != 0):
        col_tile = pe_dim  # fall back to a single full-width block
    n_col_blocks = pe_dim // col_tile

    # Pad rows so any row_tile works for any (bsz, nsmpl); padded rows are
    # zeros -> cos(0)*exp_var = finite values that get sliced off below.
    if padded_rows != rows:
        coords2d = jnp.pad(coords2d, ((0, padded_rows - rows), (0, 0)))

    # --- VMEM budget ----------------------------------------------------------
    out_itemsize = jnp.dtype(out_dtype).itemsize
    working_set = (
        2 * row_tile * 128 * 4              # coords tile (dim lane-pads to 128), double-buffered
        + 2 * row_tile * col_tile * out_itemsize  # output tile, double-buffered
        + 2 * 8 * col_tile * 4              # mappings block (sublane-padded)
        + 2 * 8 * col_tile * 4              # exp_var block
    )
    # Cap at 64 MiB so the same configuration is safe on v7x's smaller VMEM.
    vmem_limit = int(min(64 << 20, max(32 << 20, 2 * working_set)))

    out = pl.pallas_call(
        inte_pe_rand_kernel,
        out_shape=jax.ShapeDtypeStruct((padded_rows, pe_dim), out_dtype),
        grid_spec=pltpu.PrefetchScalarGridSpec(
            num_scalar_prefetch=0,
            grid=(padded_rows // row_tile, n_col_blocks),
            in_specs=[
                pl.BlockSpec((row_tile, dim), lambda i, j: (i, 0)),   # coords tile over rows
                pl.BlockSpec((dim, col_tile), lambda i, j: (0, j)),   # mappings, resident over rows
                pl.BlockSpec((1, col_tile), lambda i, j: (0, j)),     # exp_var, resident over rows
            ],
            out_specs=pl.BlockSpec((row_tile, col_tile), lambda i, j: (i, j)),
        ),
        compiler_params=pltpu.CompilerParams(
            dimension_semantics=("parallel", "parallel"),
            vmem_limit_bytes=vmem_limit,
        ),
    )(coords2d, mappings, exp_var)

    out = out[:rows]
    return out.reshape(*lead, pe_dim)


def inte_pe_rand_reference(coords, covar, mappings):
    enc = jnp.einsum("...d,dp->...p", coords, mappings)
    exp_var = jnp.exp(-0.5 * jnp.sum((mappings ** 2) * covar[:, None], axis=0))
    return jnp.cos(enc) * exp_var


if __name__ == "__main__":
    # Module hyperparameters (synthetic, deterministic init — no checkpoint load).
    dim = 4
    pe_dim = 128
    omega = 1.0
    bsz, nsmpl = 2, 8

    key = jax.random.PRNGKey(0)
    k_map, k_coords, k_covar = jax.random.split(key, 3)

    # self.mappings: stack of dim rows, each 2*pi*omega*randn(pe_dim).
    mappings = 2.0 * jnp.pi * omega * jax.random.normal(k_map, (dim, pe_dim), dtype=jnp.float32)

    # forward input: (coords, covar); covar is one variance scalar per coordinate dim.
    coords = jax.random.normal(k_coords, (bsz, nsmpl, dim), dtype=jnp.float32)
    covar = jax.random.uniform(k_covar, (dim,), dtype=jnp.float32, minval=0.0, maxval=0.1)

    out = inte_pe_rand(coords, covar, mappings)
    out = jax.block_until_ready(out)

    ref = inte_pe_rand_reference(coords, covar, mappings)
    np.testing.assert_allclose(np.asarray(out), np.asarray(ref), rtol=1e-5, atol=1e-5)
    assert out.shape == (bsz, nsmpl, pe_dim)

    # Also exercise an awkward (non-multiple-of-tile) row count to prove the
    # padding path is correct.
    coords_odd = jax.random.normal(k_coords, (3, 5, dim), dtype=jnp.float32)
    out_odd = jax.block_until_ready(inte_pe_rand(coords_odd, covar, mappings, row_tile=512))
    ref_odd = inte_pe_rand_reference(coords_odd, covar, mappings)
    np.testing.assert_allclose(np.asarray(out_odd), np.asarray(ref_odd), rtol=1e-5, atol=1e-5)

    print("KERNEL_OK")
</pallas_src>

<mosaic_0001>
module attributes {stable_mosaic.version = 11 : i64} {
  func.func @inte_pe_rand_kernel(%arg0: i32, %arg1: i32, %arg2: memref<16x4xf32, #tpu.memory_space<vmem>>, %arg3: memref<4x128xf32, #tpu.memory_space<vmem>>, %arg4: memref<1x128xf32, #tpu.memory_space<vmem>>, %arg5: memref<16x128xf32, #tpu.memory_space<vmem>>) attributes {dimension_semantics = [#tpu.dimension_semantics<parallel>, #tpu.dimension_semantics<parallel>], iteration_bounds = array<i64: 1, 1>, scalar_prefetch = 0 : i64, scratch_operands = 0 : i64, tpu.core_type = #tpu.core_type<tc>, window_params = [{transform_indices = @transform_0, window_bounds = array<i64: 16, 4>}, {transform_indices = @transform_1, window_bounds = array<i64: 4, 128>}, {transform_indices = @transform_2, window_bounds = array<i64: 1, 128>}, {transform_indices = @transform_3, window_bounds = array<i64: 16, 128>}]} {
    %c0 = arith.constant 0 : index
    %c0_0 = arith.constant 0 : index
    %0 = vector.load %arg2[%c0, %c0_0] : memref<16x4xf32, #tpu.memory_space<vmem>>, vector<16x4xf32>
    %c0_1 = arith.constant 0 : index
    %c0_2 = arith.constant 0 : index
    %1 = vector.load %arg3[%c0_1, %c0_2] : memref<4x128xf32, #tpu.memory_space<vmem>>, vector<4x128xf32>
    %cst = arith.constant dense<0.000000e+00> : vector<16x128xf32>
    %2 = tpu.matmul %0, %1, %cst {dimension_numbers = #tpu.dot_dimension_numbers<[1], [0], [0], [1], [0, 0, 1, 1], [], []>} : vector<16x4xf32>, vector<4x128xf32>, vector<16x128xf32> -> vector<16x128xf32>
    %3 = math.cos %2 : vector<16x128xf32>
    %c0_3 = arith.constant 0 : index
    %c0_4 = arith.constant 0 : index
    %4 = vector.load %arg4[%c0_3, %c0_4] : memref<1x128xf32, #tpu.memory_space<vmem>>, vector<1x128xf32>
    %5 = vector.broadcast %4 : vector<1x128xf32> to vector<16x128xf32>
    %6 = arith.mulf %3, %5 : vector<16x128xf32>
    %c0_5 = arith.constant 0 : index
    %c0_6 = arith.constant 0 : index
    %7 = vector.load %arg5[%c0_5, %c0_6] : memref<16x128xf32, #tpu.memory_space<vmem>>, vector<16x128xf32>
    tpu.vector_store %arg5[%c0_5, %c0_6], %6 {strides = array<i32>} : memref<16x128xf32, #tpu.memory_space<vmem>>, vector<16x128xf32>,
    return
  }
  func.func @transform_0(%arg0: i32, %arg1: i32) -> (i32, i32) {
    %c0_i32 = arith.constant 0 : i32
    %c0_i32_0 = arith.constant 0 : i32
    return %arg0, %c0_i32 : i32, i32
  }
  func.func @transform_1(%arg0: i32, %arg1: i32) -> (i32, i32) {
    %c0_i32 = arith.constant 0 : i32
    %c0_i32_0 = arith.constant 0 : i32
    return %c0_i32, %arg1 : i32, i32
  }
  func.func @transform_2(%arg0: i32, %arg1: i32) -> (i32, i32) {
    %c0_i32 = arith.constant 0 : i32
    %c0_i32_0 = arith.constant 0 : i32
    return %c0_i32, %arg1 : i32, i32
  }
  func.func @transform_3(%arg0: i32, %arg1: i32) -> (i32, i32) {
    %c0_i32 = arith.constant 0 : i32
    return %arg0, %arg1 : i32, i32
  }
}

</mosaic_0001>

<llo_original>
// kernel: tpu_custom_call.1
$region0: #{tpu_custom_call.1}
  #allocation0 [shape = 'u32[]', space=smem, size = 0x4, offset = 0x4, fixed_abs, tag = 'smem constant byte address 0x4 - core index']
  #allocation1 [shape = 'u32[144,128]{1,0:T(1,128)}', space=vmem, size = 0x12000, scoped, tag = 'internal scratch']
  %s0 = inlined_call_operand.vmem [shape: f32[16,4], index: 0, kind: input, shape index: {}]
  %s1 = inlined_call_operand.vmem [shape: f32[4,128], index: 1, kind: input, shape index: {}]
  %s2 = inlined_call_operand.vmem [shape: f32[1,128], index: 2, kind: input, shape index: {}]
  %s3 = inlined_call_operand.hbm [shape: f32[16,128], index: 3, kind: output, shape index: {}]
  %s4 = sld [smem:[#allocation0]]
  $region22: #{tpu_custom_call.1} parent=0
    _
  %s6 = ssub.s32 1, %s4
  %s7 = scalar_select 0, %s6, %s4
  $region1: #{tpu_custom_call.1} parent=0
    #allocation2 [shape = 'u8[8192]{0}', space=vmem, size = 0x2000, scoped, tag = 'output window, operand 0, single buffered']
    #allocation3 [shape = 's32[1]{0}', space=sflag, size = 0x4, scoped, tag = 'scoped memory for tpu_custom_call.1']
    %8 = vsyncpa [#allocation3], 0
    // Predicated region
    $region2: #{tpu_custom_call.1} parent=1 // pred_check
      _
    $region3: #{tpu_custom_call.1} parent=1 // pred_check_branch
      %10 = sbr.rel (0) target = $region5
    $region4: #{tpu_custom_call.1} parent=1 // pred_region
      _
    $region5: #{tpu_custom_call.1} parent=1 // pred_fallthru
      _
    // Predicated region
    $region6: #{tpu_custom_call.1} parent=1 // pred_check
      _
    $region7: #{tpu_custom_call.1} parent=1 // pred_check_branch
      %12 = sbr.rel (0) target = $region9
    $region8: #{tpu_custom_call.1} parent=1 // pred_region
      _
    $region9: #{tpu_custom_call.1} parent=1 // pred_fallthru
      _
    // Predicated region
    $region10: #{tpu_custom_call.1} parent=1 // pred_check
      _
    $region11: #{tpu_custom_call.1} parent=1 // pred_check_branch
      %14 = sbr.rel (0) target = $region13
    $region12: #{tpu_custom_call.1} parent=1 // pred_region
      _
    $region13: #{tpu_custom_call.1} parent=1 // pred_fallthru
      _
    %v15 = vld [vmem:[%s0] sm:$0xff]
    %v16 = vld [vmem:[%s0 + $0x8] sm:$0xff]
    %v17 = vld [vmem:[%s1] sm:$0xf]
    %vm18 = vcmask 31744
    %v20 = vsel %vm18, %v15, 0
    %v23 = vsel %vm18, %v16, 0
    %vm25 = vcmask 1043456
    %v27 = vsel %vm25, %v17, 0
    %29 = vmatprep.subr.mxu0 0.0
    %30 = vmatpush1.msra.mxu0 %v27
    %31 = vmatprep.subr.mxu0 0.0
    %32 = vmatpush1.msra.mxu0 0.0
    %33 = vmatprep.subr.mxu0 0.0
    %34 = vmatpush1.msra.mxu0 0.0
    %35 = vmatprep.subr.mxu0 0.0
    %36 = vmatpush1.msra.mxu0 0.0
    %37 = vmatprep.subr.mxu0 0.0
    %38 = vmatpush1.msra.mxu0 0.0
    %39 = vmatprep.subr.mxu0 0.0
    %40 = vmatpush1.msra.mxu0 0.0
    %41 = vmatprep.subr.mxu0 0.0
    %42 = vmatpush1.msra.mxu0 0.0
    %43 = vmatprep.subr.mxu0 0.0
    %44 = vmatpush1.msra.mxu0 0.0
    %45 = vmatprep.subr.mxu0 0.0
    %46 = vmatpush1.msra.mxu0 0.0
    %47 = vmatprep.subr.mxu0 0.0
    %48 = vmatpush1.msra.mxu0 0.0
    %49 = vmatprep.subr.mxu0 0.0
    %50 = vmatpush1.msra.mxu0 0.0
    %51 = vmatprep.subr.mxu0 0.0
    %52 = vmatpush1.msra.mxu0 0.0
    %53 = vmatprep.subr.mxu0 0.0
    %54 = vmatpush1.msra.mxu0 0.0
    %55 = vmatprep.subr.mxu0 0.0
    %56 = vmatpush1.msra.mxu0 0.0
    %57 = vmatprep.subr.mxu0 0.0
    %58 = vmatpush1.msra.mxu0 0.0
    %59 = vmatprep.subr.mxu0 0.0
    %60 = vmatpush1.msra.mxu0 0.0
    %61 = vmatprep.subr.mxu0 0.0
    %62 = vmatpush1.msra.mxu0 0.0
    %63 = vmatprep.subr.mxu0 0.0
    %64 = vmatpush1.msra.mxu0 0.0
    %65 = vmatprep.subr.mxu0 0.0
    %66 = vmatpush1.msra.mxu0 0.0
    %67 = vmatprep.subr.mxu0 0.0
    %68 = vmatpush1.msra.mxu0 0.0
    %69 = vmatprep.subr.mxu0 0.0
    %70 = vmatpush1.msra.mxu0 0.0
    %71 = vmatprep.subr.mxu0 0.0
    %72 = vmatpush1.msra.mxu0 0.0
    %73 = vmatprep.subr.mxu0 0.0
    %74 = vmatpush1.msra.mxu0 0.0
    %75 = vmatprep.subr.mxu0 0.0
    %76 = vmatpush1.msra.mxu0 0.0
    %77 = vmatprep.subr.mxu0 0.0
    %78 = vmatpush1.msra.mxu0 0.0
    %79 = vmatprep.subr.mxu0 0.0
    %80 = vmatpush1.msra.mxu0 0.0
    %81 = vmatprep.subr.mxu0 0.0
    %82 = vmatpush1.msra.mxu0 0.0
    %83 = vmatprep.subr.mxu0 0.0
    %84 = vmatpush1.msra.mxu0 0.0
    %85 = vmatprep.subr.mxu0 0.0
    %86 = vmatpush1.msra.mxu0 0.0
    %87 = vmatprep.subr.mxu0 0.0
    %88 = vmatpush1.msra.mxu0 0.0
    %89 = vmatprep.subr.mxu0 0.0
    %90 = vmatpush1.msra.mxu0 0.0
    %91 = vmatprep.subr.mxu0 0.0
    %92 = vmatpush1.msra.mxu0 0.0
    %93 = vmatprep.mubr.f32.mxu0 0.0
    %94 = vmatmul.mubr.f32.gmra.mrb[0].mxu0 %v20
    %v95 = vpop.f32.mrb[0].mxu0
    %v96 = vadd.f32 0.0, %v95
    %v97 = vpop.f32.mrb[0].mxu0
    %98 = vmatprep.mubr.f32.mxu0 0.0
    %99 = vmatmul.mubr.f32.gmra.mrb[0].mxu0 %v23
    %v100 = vpop.f32.mrb[0].mxu0
    %v101 = vadd.f32 0.0, %v100
    %v102 = vpop.f32.mrb[0].mxu0
    %103 = vdwg.mxu0
    %v104 = vand.u32 2147483647, %v96
    %vm105 = vcmp.le.f32.partialorder %v104, 0.7853982
    %vm106 = vcmp.lt.s32.totalorder %v96, 0
    %v107 = vand.u32 %v96, 2139095040
    %v108 = vshrl.u32 %v107, 23
    %v109 = vsub.s32 %v108, 127
    %v110 = vand.u32 2147483647, %v96
    %v111 = vand.u32 %v110, 8388607
    %v112 = vor.u32 %v111, 8388608
    %v113 = vsub.s32 0, %v112
    %v114 = vadd.s32 %v109, 1
    %vm115 = vcmp.gt.s32.totalorder %v114, 0
    %v116 = vsel %vm115, %v114, 0
    %v117 = vshrl.u32 %v116, 5
    %v118 = vand.u32 %v116, 31
    %v119 = vsub.s32 32, %v118
    %v120 = vshrl.u32 683565275, %v119
    %v121 = vshll.u32 683565275, %v118
    %v122 = vshrl.u32 2475754826, %v119
    %v123 = vor.u32 %v121, %v122
    %v124 = vshll.u32 2475754826, %v118
    %v125 = vshrl.u32 2131351028, %v119
    %v126 = vor.u32 %v124, %v125
    %v127 = vshll.u32 2131351028, %v118
    %v128 = vshrl.u32 2102212464, %v119
    %v129 = vor.u32 %v127, %v128
    %v130 = vshll.u32 2102212464, %v118
    %v131 = vshrl.u32 920167782, %v119
    %v132 = vor.u32 %v130, %v131
    %v133 = vshll.u32 920167782, %v118
    %v134 = vshrl.u32 1326507024, %v119
    %v135 = vor.u32 %v133, %v134
    %vm136 = vcmp.lt.s32.totalorder %v117, 1
    %vm137 = vcmp.lt.s32.totalorder %v117, 2
    %vm138 = vcmp.lt.s32.totalorder %v117, 3
    %vm139 = vcmp.lt.s32.totalorder %v117, 4
    %v140 = vsel %vm136, %v120, %v123
    %v141 = vsel %vm139, %v129, 2102212464
    %v142 = vsel %vm138, %v126, %v141
    %v143 = vsel %vm137, %v140, %v142
    %v144 = vsel %vm136, %v123, %v126
    %v145 = vsel %vm139, %v132, 920167782
    %v146 = vsel %vm138, %v129, %v145
    %v147 = vsel %vm137, %v144, %v146
    %v148 = vsel %vm136, %v126, %v129
    %v149 = vsel %vm139, %v135, 1326507024
    %v150 = vsel %vm138, %v132, %v149
    %v151 = vsel %vm137, %v148, %v150
    %v152 = vshll.u32 %v112, 8
    %v153 = vmul.u32.u64.compose %v152, %v151
    %v154 = vextract.low.u32 %v153
    %v155 = vextract.high.u32 %v153
    %v156 = vmul.u32.u64.compose %v152, %v147
    %v157 = vextract.low.u32 %v156
    %v158 = vextract.high.u32 %v156
    %v159 = vmul.u32 %v152, %v143
    %v160 = vadd.s32 %v155, %v157
    %vm161 = vc.u32 %v155, %v157
    %v162 = vadd.s32 %v158, 1
    %v163 = vsel %vm161, %v162, %v158
    %v164 = vadd.s32 %v159, %v163
    %v165 = vadd.s32 %v164, 536870912
    %v166 = vshrl.u32 %v165, 30
    %v167 = vshll.u32 %v166, 30
    %v168 = vsub.s32 %v164, %v167
    %vm169 = vcmp.lt.s32.totalorder %v168, 0
    %v170 = vsub.s32 0, %v168
    %v171 = vsel %vm169, %v170, %v168
    %v172 = vclz %v171
    %v173 = vsub.s32 %v172, 2
    %vm174 = vcmp.gt.s32.totalorder 0, %v173
    %v175 = vsel %vm174, 0, %v173
    %v176 = vsub.s32 32, %v175
    %v177 = vshll.u32 %v168, %v175
    %v178 = vshrl.u32 %v160, %v176
    %v179 = vor.u32 %v177, %v178
    %v180 = vsub.s32 4294967266, %v175
    %v181 = vadd.s32 %v180, 127
    %v182 = vshll.u32 %v181, 23
    %v183 = vor.u32 4788187, %v182
    %v184 = vand.u32 2147483647, %v183
    %v186 = vcvt.s32.f32 %v179
    %v187 = vmul.f32 %v186, %v184
    %v188 = vxor.u32 %v187, 2147483648
    %v189 = vsel %vm106, %v188, %v187
    %v190 = vsub.s32 4, %v166
    %v191 = vsel %vm106, %v190, %v166
    %v192 = vsel %vm105, %v96, %v189
    %v193 = vsel %vm105, 0, %v191
    %v194 = vcosq.f32.pop %v192
    %v195 = vsinq.f32.pop %v192
    %vm196 = vweird.f32 %v96
    %v197 = vand.u32 %v193, 3
    %vm198 = vcmp.lt.s32.totalorder %v197, 2
    %vm199 = vcmp.eq.s32.totalorder %v197, 0
    %v200 = vxor.u32 %v195, 2147483648
    %v201 = vsel %vm199, %v194, %v200
    %vm202 = vcmp.eq.s32.totalorder %v197, 2
    %v203 = vxor.u32 %v194, 2147483648
    %v204 = vsel %vm202, %v203, %v195
    %v205 = vsel %vm198, %v201, %v204
    %v206 = vsel %vm196, nan, %v205
    %v207 = vand.u32 2147483647, %v101
    %vm208 = vcmp.le.f32.partialorder %v207, 0.7853982
    %vm209 = vcmp.lt.s32.totalorder %v101, 0
    %v210 = vand.u32 %v101, 2139095040
    %v211 = vshrl.u32 %v210, 23
    %v212 = vsub.s32 %v211, 127
    %v213 = vand.u32 2147483647, %v101
    %v214 = vand.u32 %v213, 8388607
    %v215 = vor.u32 %v214, 8388608
    %v216 = vsub.s32 0, %v215
    %v217 = vadd.s32 %v212, 1
    %vm218 = vcmp.gt.s32.totalorder %v217, 0
    %v219 = vsel %vm218, %v217, 0
    %v220 = vshrl.u32 %v219, 5
    %v221 = vand.u32 %v219, 31
    %v222 = vsub.s32 32, %v221
    %v223 = vshrl.u32 683565275, %v222
    %v224 = vshll.u32 683565275, %v221
    %v225 = vshrl.u32 2475754826, %v222
    %v226 = vor.u32 %v224, %v225
    %v227 = vshll.u32 2475754826, %v221
    %v228 = vshrl.u32 2131351028, %v222
    %v229 = vor.u32 %v227, %v228
    %v230 = vshll.u32 2131351028, %v221
    %v231 = vshrl.u32 2102212464, %v222
    %v232 = vor.u32 %v230, %v231
    %v233 = vshll.u32 2102212464, %v221
    %v234 = vshrl.u32 920167782, %v222
    %v235 = vor.u32 %v233, %v234
    %v236 = vshll.u32 920167782, %v221
    %v237 = vshrl.u32 1326507024, %v222
    %v238 = vor.u32 %v236, %v237
    %vm239 = vcmp.lt.s32.totalorder %v220, 1
    %vm240 = vcmp.lt.s32.totalorder %v220, 2
    %vm241 = vcmp.lt.s32.totalorder %v220, 3
    %vm242 = vcmp.lt.s32.totalorder %v220, 4
    %v243 = vsel %vm239, %v223, %v226
    %v244 = vsel %vm242, %v232, 2102212464
    %v245 = vsel %vm241, %v229, %v244
    %v246 = vsel %vm240, %v243, %v245
    %v247 = vsel %vm239, %v226, %v229
    %v248 = vsel %vm242, %v235, 920167782
    %v249 = vsel %vm241, %v232, %v248
    %v250 = vsel %vm240, %v247, %v249
    %v251 = vsel %vm239, %v229, %v232
    %v252 = vsel %vm242, %v238, 1326507024
    %v253 = vsel %vm241, %v235, %v252
    %v254 = vsel %vm240, %v251, %v253
    %v255 = vshll.u32 %v215, 8
    %v256 = vmul.u32.u64.compose %v255, %v254
    %v257 = vextract.low.u32 %v256
    %v258 = vextract.high.u32 %v256
    %v259 = vmul.u32.u64.compose %v255, %v250
    %v260 = vextract.low.u32 %v259
    %v261 = vextract.high.u32 %v259
    %v262 = vmul.u32 %v255, %v246
    %v263 = vadd.s32 %v258, %v260
    %vm264 = vc.u32 %v258, %v260
    %v265 = vadd.s32 %v261, 1
    %v266 = vsel %vm264, %v265, %v261
    %v267 = vadd.s32 %v262, %v266
    %v268 = vadd.s32 %v267, 536870912
    %v269 = vshrl.u32 %v268, 30
    %v270 = vshll.u32 %v269, 30
    %v271 = vsub.s32 %v267, %v270
    %vm272 = vcmp.lt.s32.totalorder %v271, 0
    %v273 = vsub.s32 0, %v271
    %v274 = vsel %vm272, %v273, %v271
    %v275 = vclz %v274
    %v276 = vsub.s32 %v275, 2
    %vm277 = vcmp.gt.s32.totalorder 0, %v276
    %v278 = vsel %vm277, 0, %v276
    %v279 = vsub.s32 32, %v278
    %v280 = vshll.u32 %v271, %v278
    %v281 = vshrl.u32 %v263, %v279
    %v282 = vor.u32 %v280, %v281
    %v283 = vsub.s32 4294967266, %v278
    %v284 = vadd.s32 %v283, 127
    %v285 = vshll.u32 %v284, 23
    %v286 = vor.u32 4788187, %v285
    %v287 = vand.u32 2147483647, %v286
    %v289 = vcvt.s32.f32 %v282
    %v290 = vmul.f32 %v289, %v287
    %v291 = vxor.u32 %v290, 2147483648
    %v292 = vsel %vm209, %v291, %v290
    %v293 = vsub.s32 4, %v269
    %v294 = vsel %vm209, %v293, %v269
    %v295 = vsel %vm208, %v101, %v292
    %v296 = vsel %vm208, 0, %v294
    %v297 = vcosq.f32.pop %v295
    %v298 = vsinq.f32.pop %v295
    %vm299 = vweird.f32 %v101
    %v300 = vand.u32 %v296, 3
    %vm301 = vcmp.lt.s32.totalorder %v300, 2
    %vm302 = vcmp.eq.s32.totalorder %v300, 0
    %v303 = vxor.u32 %v298, 2147483648
    %v304 = vsel %vm302, %v297, %v303
    %vm305 = vcmp.eq.s32.totalorder %v300, 2
    %v306 = vxor.u32 %v297, 2147483648
    %v307 = vsel %vm305, %v306, %v298
    %v308 = vsel %vm301, %v304, %v307
    %v309 = vsel %vm299, nan, %v308
    %v310 = vld [vmem:[%s2] sm:$0x1]
    %v312 = vlaneseq
    %v313 = vshrl.u32 %v312, 7
    %v314 = vsub.s32 0, %v313
    %v315 = vrot.slane %v310, %v314
    %v317 = vmul.f32 %v206, %v315
    %v318 = vmul.f32 %v309, %v315
    %319 = vst [vmem:[#allocation2] sm:$0xff] %v317
    %320 = vst [vmem:[#allocation2 + $0x8] sm:$0xff] %v318
    // Predicated region
    $region14: #{tpu_custom_call.1} parent=1 // pred_check
      _
    $region15: #{tpu_custom_call.1} parent=1 // pred_check_branch
      %322 = sbr.rel (0) target = $region17
    $region16: #{tpu_custom_call.1} parent=1 // pred_region
      %s324 = ssub.s32 256, 256
      %325 = vsyncadd [#allocation3], %s324
      %s326 = sshll.u32 [#allocation2], 4
      %s327 = int_to_ptr.vmem [resolvable:$true] %s326
      %332 = dma.vmem_to_hbm [thread:$0]  %s327, 256, %s3, [#allocation3], 128, 128, 8
    $region17: #{tpu_custom_call.1} parent=1 // pred_fallthru
      _
    // Predicated region
    $region18: #{tpu_custom_call.1} parent=1 // pred_check
      _
    $region19: #{tpu_custom_call.1} parent=1 // pred_check_branch
      %334 = sbr.rel (0) target = $region21
    $region20: #{tpu_custom_call.1} parent=1 // pred_region
      %335 = dma.done [#allocation3], 256
    $region21: #{tpu_custom_call.1} parent=1 // pred_fallthru
      _
    %336 = vsyncpa [#allocation3], 1

</llo_original>
